<compile_context>
chip_gen: v7x
topology: tpu7x:2x2x1
jax: 0.10.0
libtpu: 0.0.40
codegen_flags: <defaults>
</compile_context>

<pallas_src>
import functools

import jax
import jax.numpy as jnp
from jax.experimental import pallas as pl
from jax.experimental.pallas import tpu as pltpu

D_IN, H1, H2, D_OUT = 28 * 28, 128, 64, 32


def _round_up(n: int, m: int) -> int:
    return ((n + m - 1) // m) * m


def _encoder_kernel(x_ref, w1_ref, b1_ref, w2_ref, b2_ref, w3_ref, b3_ref,
                    o_ref):
    # Layer 1: (TB, 784) @ (784, 128) + (1, 128) -> ReLU
    h = jnp.dot(x_ref[...], w1_ref[...], preferred_element_type=jnp.float32)
    # Cast back to the weight dtype between layers: no-op for f32, keeps the
    # inner matmuls on the native bf16 MXU path for the bf16 fast path.
    h = jnp.maximum(h + b1_ref[...], 0.0).astype(w2_ref.dtype)
    # Layer 2: (TB, 128) @ (128, 64) + (1, 64) -> ReLU
    h = jnp.dot(h, w2_ref[...], preferred_element_type=jnp.float32)
    h = jnp.maximum(h + b2_ref[...], 0.0).astype(w3_ref.dtype)
    # Layer 3: (TB, 64) @ (64, 32) + (1, 32)
    h = jnp.dot(h, w3_ref[...], preferred_element_type=jnp.float32)
    o_ref[...] = (h + b3_ref[...]).astype(o_ref.dtype)   # f32 output, always


@functools.partial(jax.jit, static_argnames=("tile_b",))
def encoder_forward(x, params, *, tile_b=None):
    """x: [B, 784] (f32 or bf16). params: w1,b1,w2,b2,w3,b3 (w's are [in,out]).

    Output is always f32 ([B, 32]). For the bf16 fast path, pass x already in
    bf16 and weights pre-cast with `params_to_bf16` (do NOT cast per call).
    """
    B = x.shape[0]
    itemsize = jnp.dtype(x.dtype).itemsize

    # Sublane packing: 8 rows/vreg for 32-bit, 16 for 16-bit, 32 for 8-bit.
    align = {1: 32, 2: 16}.get(itemsize, 8)

    # Default tile: HBM-bound on the x read, so go as big as comfortably fits
    # every generation's default scoped VMEM (v5e 16 MiB is the binding cap).
    #   f32 @1024 rows: x db 6.4 MiB + out db 0.25 MiB + weights ~0.9 MiB
    #   bf16@2048 rows: x db 6.4 MiB + out db 0.5  MiB + weights ~0.5 MiB
    if tile_b is None:
        tile_b = 2048 if itemsize <= 2 else 1024

    # Prefer >= 2 grid steps (v7x has 2 TensorCores; "parallel" only helps
    # with >= 2 steps), capped at tile_b, rows always a multiple of `align`.
    tb = min(_round_up(tile_b, align), _round_up(max(1, -(-B // 2)), align))
    tb = max(tb, align)
    grid = (pl.cdiv(B, tb),)   # ragged last block: OOB output rows dropped

    w1, b1 = params["w1"], params["b1"]
    w2, b2 = params["w2"], params["b2"]
    w3, b3 = params["w3"], params["b3"]

    rep = lambda i: (0, 0)  # weights/biases: same block every grid step

    out = pl.pallas_call(
        _encoder_kernel,
        out_shape=jax.ShapeDtypeStruct((B, D_OUT), jnp.float32),
        grid_spec=pltpu.PrefetchScalarGridSpec(
            num_scalar_prefetch=0,
            grid=grid,
            in_specs=[
                pl.BlockSpec((tb, D_IN), lambda i: (i, 0)),  # x tile
                pl.BlockSpec((D_IN, H1), rep),               # w1
                pl.BlockSpec((1, H1), rep),                  # b1 (f32)
                pl.BlockSpec((H1, H2), rep),                 # w2
                pl.BlockSpec((1, H2), rep),                  # b2 (f32)
                pl.BlockSpec((H2, D_OUT), rep),              # w3
                pl.BlockSpec((1, D_OUT), rep),               # b3 (f32)
            ],
            out_specs=pl.BlockSpec((tb, D_OUT), lambda i: (i, 0)),
        ),
        # Batch axis is embarrassingly parallel -> shard across TensorCores on
        # megacore parts. All reductions are inside each block.
        compiler_params=pltpu.CompilerParams(
            dimension_semantics=("parallel",)),
    )(x, w1, b1.reshape(1, H1), w2, b2.reshape(1, H2), w3,
      b3.reshape(1, D_OUT))
    return out


def params_to_bf16(params):
    """One-time weight cast for the bf16 fast path (cache the result; do not
    call per forward). Biases stay f32."""
    out = dict(params)
    for k in ("w1", "w2", "w3"):
        out[k] = params[k].astype(jnp.bfloat16)
    return out


def init_params(key):
    """Deterministic synthetic parameters matching nn.Linear init/shapes.

    PyTorch stores Linear weight as [out, in]; we keep [in, out] for the
    kernel's row-major matmul (mathematically identical forward pass).
    """
    keys = jax.random.split(key, 6)

    def uniform(k, shape, fan_in):
        bound = 1.0 / jnp.sqrt(fan_in)
        return jax.random.uniform(k, shape, jnp.float32, -bound, bound)

    return {
        "w1": uniform(keys[0], (D_IN, H1), D_IN),
        "b1": uniform(keys[1], (H1,), D_IN),
        "w2": uniform(keys[2], (H1, H2), H1),
        "b2": uniform(keys[3], (H2,), H1),
        "w3": uniform(keys[4], (H2, D_OUT), H2),
        "b3": uniform(keys[5], (D_OUT,), H2),
    }


def _reference(x, p):
    h = jnp.maximum(x @ p["w1"] + p["b1"], 0.0)
    h = jnp.maximum(h @ p["w2"] + p["b2"], 0.0)
    return h @ p["w3"] + p["b3"]


if __name__ == "__main__":
    key = jax.random.PRNGKey(0)
    k_x, k_p = jax.random.split(key)
    params = init_params(k_p)

    # Small demo batch (tile clamps to 8 rows, grid=1).
    x_small = jax.random.normal(k_x, (8, D_IN), jnp.float32)
    out_small = jax.block_until_ready(encoder_forward(x_small, params))
    ref_small = _reference(x_small, params)
    assert out_small.shape == (8, D_OUT) and out_small.dtype == jnp.float32
    assert jnp.allclose(out_small, ref_small, atol=1e-4, rtol=1e-4), \
        "mismatch vs reference (small batch)"

    # Batch that is not a multiple of the tile: exercises the ragged last
    # block (no wrapper-side padding) and a >=2-step "parallel" grid.
    x_big = jax.random.normal(k_x, (600, D_IN), jnp.float32)
    out_big = jax.block_until_ready(encoder_forward(x_big, params))
    ref_big = _reference(x_big, params)
    assert out_big.shape == (600, D_OUT) and out_big.dtype == jnp.float32
    assert jnp.allclose(out_big, ref_big, atol=1e-4, rtol=1e-4), \
        "mismatch vs reference (ragged batch)"

    # bf16 fast path: caller supplies bf16 x and weights pre-cast ONCE
    # (here the demo casts outside the forward; a real producer would emit
    # bf16 directly so no extra HBM pass happens).
    params_bf16 = params_to_bf16(params)
    x_bf16 = x_big.astype(jnp.bfloat16)
    out_bf16 = jax.block_until_ready(encoder_forward(x_bf16, params_bf16))
    assert out_bf16.shape == (600, D_OUT) and out_bf16.dtype == jnp.float32
    assert jnp.allclose(out_bf16, ref_big, atol=1e-1, rtol=1e-1), \
        "mismatch vs reference (bf16 fast path)"

    print("KERNEL_OK")
</pallas_src>

<mosaic_0001>
module attributes {stable_mosaic.version = 11 : i64} {
  func.func @_encoder_kernel(%arg0: i32, %arg1: memref<8x784xf32, #tpu.memory_space<vmem>>, %arg2: memref<784x128xf32, #tpu.memory_space<vmem>>, %arg3: memref<1x128xf32, #tpu.memory_space<vmem>>, %arg4: memref<128x64xf32, #tpu.memory_space<vmem>>, %arg5: memref<1x64xf32, #tpu.memory_space<vmem>>, %arg6: memref<64x32xf32, #tpu.memory_space<vmem>>, %arg7: memref<1x32xf32, #tpu.memory_space<vmem>>, %arg8: memref<8x32xf32, #tpu.memory_space<vmem>>) attributes {dimension_semantics = [#tpu.dimension_semantics<parallel>], iteration_bounds = array<i64: 1>, scalar_prefetch = 0 : i64, scratch_operands = 0 : i64, tpu.core_type = #tpu.core_type<tc>, window_params = [{transform_indices = @transform_0, window_bounds = array<i64: 8, 784>}, {pipeline_mode = #tpu.pipeline_mode<synchronous>, transform_indices = @transform_1, window_bounds = array<i64: 784, 128>}, {pipeline_mode = #tpu.pipeline_mode<synchronous>, transform_indices = @transform_2, window_bounds = array<i64: 1, 128>}, {pipeline_mode = #tpu.pipeline_mode<synchronous>, transform_indices = @transform_3, window_bounds = array<i64: 128, 64>}, {pipeline_mode = #tpu.pipeline_mode<synchronous>, transform_indices = @transform_4, window_bounds = array<i64: 1, 64>}, {pipeline_mode = #tpu.pipeline_mode<synchronous>, transform_indices = @transform_5, window_bounds = array<i64: 64, 32>}, {pipeline_mode = #tpu.pipeline_mode<synchronous>, transform_indices = @transform_6, window_bounds = array<i64: 1, 32>}, {transform_indices = @transform_7, window_bounds = array<i64: 8, 32>}]} {
    %c0 = arith.constant 0 : index
    %c0_0 = arith.constant 0 : index
    %0 = vector.load %arg1[%c0, %c0_0] : memref<8x784xf32, #tpu.memory_space<vmem>>, vector<8x784xf32>
    %c0_1 = arith.constant 0 : index
    %c0_2 = arith.constant 0 : index
    %1 = vector.load %arg2[%c0_1, %c0_2] : memref<784x128xf32, #tpu.memory_space<vmem>>, vector<784x128xf32>
    %cst = arith.constant dense<0.000000e+00> : vector<8x128xf32>
    %2 = tpu.matmul %0, %1, %cst {dimension_numbers = #tpu.dot_dimension_numbers<[1], [0], [0], [1], [0, 0, 1, 1], [], []>} : vector<8x784xf32>, vector<784x128xf32>, vector<8x128xf32> -> vector<8x128xf32>
    %c0_3 = arith.constant 0 : index
    %c0_4 = arith.constant 0 : index
    %3 = vector.load %arg3[%c0_3, %c0_4] : memref<1x128xf32, #tpu.memory_space<vmem>>, vector<1x128xf32>
    %4 = vector.broadcast %3 : vector<1x128xf32> to vector<8x128xf32>
    %5 = arith.addf %2, %4 : vector<8x128xf32>
    %cst_5 = arith.constant 0.000000e+00 : f32
    %6 = vector.broadcast %cst_5 : f32 to vector<8x128xf32>
    %7 = arith.maximumf %5, %6 : vector<8x128xf32>
    %c0_6 = arith.constant 0 : index
    %c0_7 = arith.constant 0 : index
    %8 = vector.load %arg4[%c0_6, %c0_7] : memref<128x64xf32, #tpu.memory_space<vmem>>, vector<128x64xf32>
    %cst_8 = arith.constant dense<0.000000e+00> : vector<8x64xf32>
    %9 = tpu.matmul %7, %8, %cst_8 {dimension_numbers = #tpu.dot_dimension_numbers<[1], [0], [0], [1], [0, 0, 1, 1], [], []>} : vector<8x128xf32>, vector<128x64xf32>, vector<8x64xf32> -> vector<8x64xf32>
    %c0_9 = arith.constant 0 : index
    %c0_10 = arith.constant 0 : index
    %10 = vector.load %arg5[%c0_9, %c0_10] : memref<1x64xf32, #tpu.memory_space<vmem>>, vector<1x64xf32>
    %11 = vector.broadcast %10 : vector<1x64xf32> to vector<8x64xf32>
    %12 = arith.addf %9, %11 : vector<8x64xf32>
    %cst_11 = arith.constant 0.000000e+00 : f32
    %13 = vector.broadcast %cst_11 : f32 to vector<8x64xf32>
    %14 = arith.maximumf %12, %13 : vector<8x64xf32>
    %c0_12 = arith.constant 0 : index
    %c0_13 = arith.constant 0 : index
    %15 = vector.load %arg6[%c0_12, %c0_13] : memref<64x32xf32, #tpu.memory_space<vmem>>, vector<64x32xf32>
    %cst_14 = arith.constant dense<0.000000e+00> : vector<8x32xf32>
    %16 = tpu.matmul %14, %15, %cst_14 {dimension_numbers = #tpu.dot_dimension_numbers<[1], [0], [0], [1], [0, 0, 1, 1], [], []>} : vector<8x64xf32>, vector<64x32xf32>, vector<8x32xf32> -> vector<8x32xf32>
    %c0_15 = arith.constant 0 : index
    %c0_16 = arith.constant 0 : index
    %17 = vector.load %arg7[%c0_15, %c0_16] : memref<1x32xf32, #tpu.memory_space<vmem>>, vector<1x32xf32>
    %18 = vector.broadcast %17 : vector<1x32xf32> to vector<8x32xf32>
    %19 = arith.addf %16, %18 : vector<8x32xf32>
    %c0_17 = arith.constant 0 : index
    %c0_18 = arith.constant 0 : index
    %20 = vector.load %arg8[%c0_17, %c0_18] : memref<8x32xf32, #tpu.memory_space<vmem>>, vector<8x32xf32>
    tpu.vector_store %arg8[%c0_17, %c0_18], %19 {strides = array<i32>} : memref<8x32xf32, #tpu.memory_space<vmem>>, vector<8x32xf32>,
    return
  }
  func.func @transform_0(%arg0: i32) -> (i32, i32) {
    %c0_i32 = arith.constant 0 : i32
    %c0_i32_0 = arith.constant 0 : i32
    return %arg0, %c0_i32 : i32, i32
  }
  func.func @transform_1(%arg0: i32) -> (i32, i32) {
    %c0_i32 = arith.constant 0 : i32
    %c0_i32_0 = arith.constant 0 : i32
    %c0_i32_1 = arith.constant 0 : i32
    return %c0_i32, %c0_i32_0 : i32, i32
  }
  func.func @transform_2(%arg0: i32) -> (i32, i32) {
    %c0_i32 = arith.constant 0 : i32
    %c0_i32_0 = arith.constant 0 : i32
    %c0_i32_1 = arith.constant 0 : i32
    return %c0_i32, %c0_i32_0 : i32, i32
  }
  func.func @transform_3(%arg0: i32) -> (i32, i32) {
    %c0_i32 = arith.constant 0 : i32
    %c0_i32_0 = arith.constant 0 : i32
    %c0_i32_1 = arith.constant 0 : i32
    return %c0_i32, %c0_i32_0 : i32, i32
  }
  func.func @transform_4(%arg0: i32) -> (i32, i32) {
    %c0_i32 = arith.constant 0 : i32
    %c0_i32_0 = arith.constant 0 : i32
    %c0_i32_1 = arith.constant 0 : i32
    return %c0_i32, %c0_i32_0 : i32, i32
  }
  func.func @transform_5(%arg0: i32) -> (i32, i32) {
    %c0_i32 = arith.constant 0 : i32
    %c0_i32_0 = arith.constant 0 : i32
    %c0_i32_1 = arith.constant 0 : i32
    return %c0_i32, %c0_i32_0 : i32, i32
  }
  func.func @transform_6(%arg0: i32) -> (i32, i32) {
    %c0_i32 = arith.constant 0 : i32
    %c0_i32_0 = arith.constant 0 : i32
    %c0_i32_1 = arith.constant 0 : i32
    return %c0_i32, %c0_i32_0 : i32, i32
  }
  func.func @transform_7(%arg0: i32) -> (i32, i32) {
    %c0_i32 = arith.constant 0 : i32
    %c0_i32_0 = arith.constant 0 : i32
    return %arg0, %c0_i32 : i32, i32
  }
}

</mosaic_0001>

<llo_original>
// kernel: encoder_forward.1
$region0: #{encoder_forward.1}
  #allocation0 [shape = 'u32[]', space=smem, size = 0x4, offset = 0x4, fixed_abs, tag = 'smem constant byte address 0x4 - core index']
  #allocation1 [shape = 'u32[144,128]{1,0:T(1,128)}', space=vmem, size = 0x12000, scoped, tag = 'internal scratch']
  %s0 = inlined_call_operand.vmem [shape: f32[8,784], index: 0, kind: input, shape index: {}]
  %s1 = inlined_call_operand.hbm [shape: f32[784,128], index: 1, kind: input, shape index: {}]
  %s2 = inlined_call_operand.vmem [shape: f32[1,128], index: 2, kind: input, shape index: {}]
  %s3 = inlined_call_operand.vmem [shape: f32[128,64], index: 3, kind: input, shape index: {}]
  %s4 = inlined_call_operand.vmem [shape: f32[1,64], index: 4, kind: input, shape index: {}]
  %s5 = inlined_call_operand.vmem [shape: f32[64,32], index: 5, kind: input, shape index: {}]
  %s6 = inlined_call_operand.vmem [shape: f32[1,32], index: 6, kind: input, shape index: {}]
  %s7 = inlined_call_operand.hbm [shape: f32[8,32], index: 7, kind: output, shape index: {}]
  %s8 = sld [smem:[#allocation0]]
  $region42: #{encoder_forward.1} parent=0
    _
  %s10 = ssub.s32 1, %s8
  %s11 = scalar_select 0, %s10, %s8
  $region1: #{encoder_forward.1} parent=0
    #allocation2 [shape = 'u8[401408]{0}', space=vmem, size = 0x62000, scoped, tag = 'input window, operand 1, single buffered']
    #allocation3 [shape = 's32[1]{0}', space=sflag, size = 0x4, scoped, tag = 'scoped memory for encoder_forward.1']
    #allocation4 [shape = 's32[1]{0}', space=sflag, size = 0x4, scoped, tag = 'scoped memory for encoder_forward.1']
    #allocation5 [shape = 'u8[4096]{0}', space=vmem, size = 0x1000, scoped, tag = 'output window, operand 0, single buffered']
    %12 = vsyncpa [#allocation3], 0
    %13 = vsyncpa [#allocation4], 0
    // Predicated region
    $region2: #{encoder_forward.1} parent=1 // pred_check
      _
    $region3: #{encoder_forward.1} parent=1 // pred_check_branch
      %15 = sbr.rel (0) target = $region5
    $region4: #{encoder_forward.1} parent=1 // pred_region
      _
    $region5: #{encoder_forward.1} parent=1 // pred_fallthru
      _
    // Predicated region
    $region6: #{encoder_forward.1} parent=1 // pred_check
      _
    $region7: #{encoder_forward.1} parent=1 // pred_check_branch
      %17 = sbr.rel (0) target = $region9
    $region8: #{encoder_forward.1} parent=1 // pred_region
      %s19 = ssub.s32 12544, 12544
      %20 = vsyncadd [#allocation3], %s19
      %s21 = sshll.u32 [#allocation2], 4
      %s22 = int_to_ptr.vmem [resolvable:$true] %s21
      %27 = dma.hbm_to_vmem [thread:$0]  %s1, 12544, %s22, [#allocation3], 128, 128, 8
    $region9: #{encoder_forward.1} parent=1 // pred_fallthru
      _
    // Predicated region
    $region10: #{encoder_forward.1} parent=1 // pred_check
      _
    $region11: #{encoder_forward.1} parent=1 // pred_check_branch
      %29 = sbr.rel (0) target = $region13
    $region12: #{encoder_forward.1} parent=1 // pred_region
      _
    $region13: #{encoder_forward.1} parent=1 // pred_fallthru
      _
    // Predicated region
    $region14: #{encoder_forward.1} parent=1 // pred_check
      _
    $region15: #{encoder_forward.1} parent=1 // pred_check_branch
      %31 = sbr.rel (0) target = $region17
    $region16: #{encoder_forward.1} parent=1 // pred_region
      _
    $region17: #{encoder_forward.1} parent=1 // pred_fallthru
      _
    // Predicated region
    $region18: #{encoder_forward.1} parent=1 // pred_check
      _
    $region19: #{encoder_forward.1} parent=1 // pred_check_branch
      %33 = sbr.rel (0) target = $region21
    $region20: #{encoder_forward.1} parent=1 // pred_region
      _
    $region21: #{encoder_forward.1} parent=1 // pred_fallthru
      _
    // Predicated region
    $region22: #{encoder_forward.1} parent=1 // pred_check
      _
    $region23: #{encoder_forward.1} parent=1 // pred_check_branch
      %35 = sbr.rel (0) target = $region25
    $region24: #{encoder_forward.1} parent=1 // pred_region
      _
    $region25: #{encoder_forward.1} parent=1 // pred_fallthru
      _
    // Predicated region
    $region26: #{encoder_forward.1} parent=1 // pred_check
      _
    $region27: #{encoder_forward.1} parent=1 // pred_check_branch
      %37 = sbr.rel (0) target = $region29
    $region28: #{encoder_forward.1} parent=1 // pred_region
      _
    $region29: #{encoder_forward.1} parent=1 // pred_fallthru
      _
    // Predicated region
    $region30: #{encoder_forward.1} parent=1 // pred_check
      _
    $region31: #{encoder_forward.1} parent=1 // pred_check_branch
      %39 = sbr.rel (0) target = $region33
    $region32: #{encoder_forward.1} parent=1 // pred_region
      %40 = dma.done [#allocation3], 12544
    $region33: #{encoder_forward.1} parent=1 // pred_fallthru
      _
    %v41 = vld [vmem:[%s0] sm:$0xff]
    %v42 = vld [vmem:[%s0 + $0x8] sm:$0xff]
    %v43 = vld [vmem:[%s0 + $0x10] sm:$0xff]
    %v44 = vld [vmem:[%s0 + $0x18] sm:$0xff]
    %v45 = vld [vmem:[%s0 + $0x20] sm:$0xff]
    %v46 = vld [vmem:[%s0 + $0x28] sm:$0xff]
    %v47 = vld [vmem:[%s0 + $0x30] sm:$0xff]
    %v48 = vld [vmem:[#allocation2] sm:$0xff]
    %v49 = vld [vmem:[#allocation2 + $0x8] sm:$0xff]
    %v50 = vld [vmem:[#allocation2 + $0x10] sm:$0xff]
    %v51 = vld [vmem:[#allocation2 + $0x18] sm:$0xff]
    %v52 = vld [vmem:[#allocation2 + $0x20] sm:$0xff]
    %v53 = vld [vmem:[#allocation2 + $0x28] sm:$0xff]
    %v54 = vld [vmem:[#allocation2 + $0x30] sm:$0xff]
    %v55 = vld [vmem:[#allocation2 + $0x38] sm:$0xff]
    %v56 = vld [vmem:[#allocation2 + $0x40] sm:$0xff]
    %v57 = vld [vmem:[#allocation2 + $0x48] sm:$0xff]
    %v58 = vld [vmem:[#allocation2 + $0x50] sm:$0xff]
    %v59 = vld [vmem:[#allocation2 + $0x58] sm:$0xff]
    %v60 = vld [vmem:[#allocation2 + $0x60] sm:$0xff]
    %v61 = vld [vmem:[#allocation2 + $0x68] sm:$0xff]
    %v62 = vld [vmem:[#allocation2 + $0x70] sm:$0xff]
    %v63 = vld [vmem:[#allocation2 + $0x78] sm:$0xff]
    %v64 = vld [vmem:[#allocation2 + $0x80] sm:$0xff]
    %v65 = vld [vmem:[#allocation2 + $0x88] sm:$0xff]
    %v66 = vld [vmem:[#allocation2 + $0x90] sm:$0xff]
    %v67 = vld [vmem:[#allocation2 + $0x98] sm:$0xff]
    %v68 = vld [vmem:[#allocation2 + $0xa0] sm:$0xff]
    %v69 = vld [vmem:[#allocation2 + $0xa8] sm:$0xff]
    %v70 = vld [vmem:[#allocation2 + $0xb0] sm:$0xff]
    %v71 = vld [vmem:[#allocation2 + $0xb8] sm:$0xff]
    %v72 = vld [vmem:[#allocation2 + $0xc0] sm:$0xff]
    %v73 = vld [vmem:[#allocation2 + $0xc8] sm:$0xff]
    %v74 = vld [vmem:[#allocation2 + $0xd0] sm:$0xff]
    %v75 = vld [vmem:[#allocation2 + $0xd8] sm:$0xff]
    %v76 = vld [vmem:[#allocation2 + $0xe0] sm:$0xff]
    %v77 = vld [vmem:[#allocation2 + $0xe8] sm:$0xff]
    %v78 = vld [vmem:[#allocation2 + $0xf0] sm:$0xff]
    %v79 = vld [vmem:[#allocation2 + $0xf8] sm:$0xff]
    %v80 = vld [vmem:[#allocation2 + $0x100] sm:$0xff]
    %v81 = vld [vmem:[#allocation2 + $0x108] sm:$0xff]
    %v82 = vld [vmem:[#allocation2 + $0x110] sm:$0xff]
    %v83 = vld [vmem:[#allocation2 + $0x118] sm:$0xff]
    %v84 = vld [vmem:[#allocation2 + $0x120] sm:$0xff]
    %v85 = vld [vmem:[#allocation2 + $0x128] sm:$0xff]
    %v86 = vld [vmem:[#allocation2 + $0x130] sm:$0xff]
    %v87 = vld [vmem:[#allocation2 + $0x138] sm:$0xff]
    %v88 = vld [vmem:[#allocation2 + $0x140] sm:$0xff]
    %v89 = vld [vmem:[#allocation2 + $0x148] sm:$0xff]
    %v90 = vld [vmem:[#allocation2 + $0x150] sm:$0xff]
    %v91 = vld [vmem:[#allocation2 + $0x158] sm:$0xff]
    %v92 = vld [vmem:[#allocation2 + $0x160] sm:$0xff]
    %v93 = vld [vmem:[#allocation2 + $0x168] sm:$0xff]
    %v94 = vld [vmem:[#allocation2 + $0x170] sm:$0xff]
    %v95 = vld [vmem:[#allocation2 + $0x178] sm:$0xff]
    %v96 = vld [vmem:[#allocation2 + $0x180] sm:$0xff]
    %v97 = vld [vmem:[#allocation2 + $0x188] sm:$0xff]
    %v98 = vld [vmem:[#allocation2 + $0x190] sm:$0xff]
    %v99 = vld [vmem:[#allocation2 + $0x198] sm:$0xff]
    %v100 = vld [vmem:[#allocation2 + $0x1a0] sm:$0xff]
    %v101 = vld [vmem:[#allocation2 + $0x1a8] sm:$0xff]
    %v102 = vld [vmem:[#allocation2 + $0x1b0] sm:$0xff]
    %v103 = vld [vmem:[#allocation2 + $0x1b8] sm:$0xff]
    %v104 = vld [vmem:[#allocation2 + $0x1c0] sm:$0xff]
    %v105 = vld [vmem:[#allocation2 + $0x1c8] sm:$0xff]
    %v106 = vld [vmem:[#allocation2 + $0x1d0] sm:$0xff]
    %v107 = vld [vmem:[#allocation2 + $0x1d8] sm:$0xff]
    %v108 = vld [vmem:[#allocation2 + $0x1e0] sm:$0xff]
    %v109 = vld [vmem:[#allocation2 + $0x1e8] sm:$0xff]
    %v110 = vld [vmem:[#allocation2 + $0x1f0] sm:$0xff]
    %v111 = vld [vmem:[#allocation2 + $0x1f8] sm:$0xff]
    %v112 = vld [vmem:[#allocation2 + $0x200] sm:$0xff]
    %v113 = vld [vmem:[#allocation2 + $0x208] sm:$0xff]
    %v114 = vld [vmem:[#allocation2 + $0x210] sm:$0xff]
    %v115 = vld [vmem:[#allocation2 + $0x218] sm:$0xff]
    %v116 = vld [vmem:[#allocation2 + $0x220] sm:$0xff]
    %v117 = vld [vmem:[#allocation2 + $0x228] sm:$0xff]
    %v118 = vld [vmem:[#allocation2 + $0x230] sm:$0xff]
    %v119 = vld [vmem:[#allocation2 + $0x238] sm:$0xff]
    %v120 = vld [vmem:[#allocation2 + $0x240] sm:$0xff]
    %v121 = vld [vmem:[#allocation2 + $0x248] sm:$0xff]
    %v122 = vld [vmem:[#allocation2 + $0x250] sm:$0xff]
    %v123 = vld [vmem:[#allocation2 + $0x258] sm:$0xff]
    %v124 = vld [vmem:[#allocation2 + $0x260] sm:$0xff]
    %v125 = vld [vmem:[#allocation2 + $0x268] sm:$0xff]
    %v126 = vld [vmem:[#allocation2 + $0x270] sm:$0xff]
    %v127 = vld [vmem:[#allocation2 + $0x278] sm:$0xff]
    %v128 = vld [vmem:[#allocation2 + $0x280] sm:$0xff]
    %v129 = vld [vmem:[#allocation2 + $0x288] sm:$0xff]
    %v130 = vld [vmem:[#allocation2 + $0x290] sm:$0xff]
    %v131 = vld [vmem:[#allocation2 + $0x298] sm:$0xff]
    %v132 = vld [vmem:[#allocation2 + $0x2a0] sm:$0xff]
    %v133 = vld [vmem:[#allocation2 + $0x2a8] sm:$0xff]
    %v134 = vld [vmem:[#allocation2 + $0x2b0] sm:$0xff]
    %v135 = vld [vmem:[#allocation2 + $0x2b8] sm:$0xff]
    %v136 = vld [vmem:[#allocation2 + $0x2c0] sm:$0xff]
    %v137 = vld [vmem:[#allocation2 + $0x2c8] sm:$0xff]
    %v138 = vld [vmem:[#allocation2 + $0x2d0] sm:$0xff]
    %v139 = vld [vmem:[#allocation2 + $0x2d8] sm:$0xff]
    %v140 = vld [vmem:[#allocation2 + $0x2e0] sm:$0xff]
    %v141 = vld [vmem:[#allocation2 + $0x2e8] sm:$0xff]
    %v142 = vld [vmem:[#allocation2 + $0x2f0] sm:$0xff]
    %v143 = vld [vmem:[#allocation2 + $0x2f8] sm:$0xff]
    %v144 = vld [vmem:[#allocation2 + $0x300] sm:$0xff]
    %v145 = vld [vmem:[#allocation2 + $0x308] sm:$0xff]
    %v146 = vld [vmem:[%s2] sm:$0x1]
    %v148 = vlaneseq
    %v149 = vshrl.u32 %v148, 7
    %v150 = vsub.s32 0, %v149
    %v151 = vrot.slane %v146, %v150
    %vm153 = vcmask 130048
    %v155 = vsel %vm153, %v47, 0
    %157 = vmatprep.subr.mxu0 0.0
    %158 = vmatpush1.msra.mxu0 %v48
    %159 = vmatprep.subr.mxu0 0.0
    %160 = vmatpush1.msra.mxu0 %v49
    %161 = vmatprep.subr.mxu0 0.0
    %162 = vmatpush1.msra.mxu0 %v50
    %163 = vmatprep.subr.mxu0 0.0
    %164 = vmatpush1.msra.mxu0 %v51
    %165 = vmatprep.subr.mxu0 0.0
    %166 = vmatpush1.msra.mxu0 %v52
    %167 = vmatprep.subr.mxu0 0.0
    %168 = vmatpush1.msra.mxu0 %v53
    %169 = vmatprep.subr.mxu0 0.0
    %170 = vmatpush1.msra.mxu0 %v54
    %171 = vmatprep.subr.mxu0 0.0
    %172 = vmatpush1.msra.mxu0 %v55
    %173 = vmatprep.subr.mxu0 0.0
    %174 = vmatpush1.msra.mxu0 %v56
    %175 = vmatprep.subr.mxu0 0.0
    %176 = vmatpush1.msra.mxu0 %v57
    %177 = vmatprep.subr.mxu0 0.0
    %178 = vmatpush1.msra.mxu0 %v58
    %179 = vmatprep.subr.mxu0 0.0
    %180 = vmatpush1.msra.mxu0 %v59
    %181 = vmatprep.subr.mxu0 0.0
    %182 = vmatpush1.msra.mxu0 %v60
    %183 = vmatprep.subr.mxu0 0.0
    %184 = vmatpush1.msra.mxu0 %v61
    %185 = vmatprep.subr.mxu0 0.0
    %186 = vmatpush1.msra.mxu0 %v62
    %187 = vmatprep.subr.mxu0 0.0
    %188 = vmatpush1.msra.mxu0 %v63
    %189 = vmatprep.subr.mxu0 0.0
    %190 = vmatpush1.msra.mxu0 %v64
    %191 = vmatprep.subr.mxu0 0.0
    %192 = vmatpush1.msra.mxu0 %v65
    %193 = vmatprep.subr.mxu0 0.0
    %194 = vmatpush1.msra.mxu0 %v66
    %195 = vmatprep.subr.mxu0 0.0
    %196 = vmatpush1.msra.mxu0 %v67
    %197 = vmatprep.subr.mxu0 0.0
    %198 = vmatpush1.msra.mxu0 %v68
    %199 = vmatprep.subr.mxu0 0.0
    %200 = vmatpush1.msra.mxu0 %v69
    %201 = vmatprep.subr.mxu0 0.0
    %202 = vmatpush1.msra.mxu0 %v70
    %203 = vmatprep.subr.mxu0 0.0
    %204 = vmatpush1.msra.mxu0 %v71
    %205 = vmatprep.subr.mxu0 0.0
    %206 = vmatpush1.msra.mxu0 %v72
    %207 = vmatprep.subr.mxu0 0.0
    %208 = vmatpush1.msra.mxu0 %v73
    %209 = vmatprep.subr.mxu0 0.0
    %210 = vmatpush1.msra.mxu0 %v74
    %211 = vmatprep.subr.mxu0 0.0
    %212 = vmatpush1.msra.mxu0 %v75
    %213 = vmatprep.subr.mxu0 0.0
    %214 = vmatpush1.msra.mxu0 %v76
    %215 = vmatprep.subr.mxu0 0.0
    %216 = vmatpush1.msra.mxu0 %v77
    %217 = vmatprep.subr.mxu0 0.0
    %218 = vmatpush1.msra.mxu0 %v78
    %219 = vmatprep.subr.mxu0 0.0
    %220 = vmatpush1.msra.mxu0 %v79
    %221 = vmatprep.mubr.f32.mxu0 %v42
    %222 = vmatmul.mubr.f32.gmra.mrb[0].mxu0 %v41
    %v223 = vpop.f32.mrb[0].mxu0
    %v224 = vadd.f32 %v151, %v223
    %v225 = vpop.f32.mrb[0].mxu0
    %226 = vdwg.mxu0
    %227 = vmatprep.subr.mxu0 0.0
    %228 = vmatpush1.msra.mxu0 %v80
    %229 = vmatprep.subr.mxu0 0.0
    %230 = vmatpush1.msra.mxu0 %v81
    %231 = vmatprep.subr.mxu0 0.0
    %232 = vmatpush1.msra.mxu0 %v82
    %233 = vmatprep.subr.mxu0 0.0
    %234 = vmatpush1.msra.mxu0 %v83
    %235 = vmatprep.subr.mxu0 0.0
    %236 = vmatpush1.msra.mxu0 %v84
    %237 = vmatprep.subr.mxu0 0.0
    %238 = vmatpush1.msra.mxu0 %v85
    %239 = vmatprep.subr.mxu0 0.0
    %240 = vmatpush1.msra.mxu0 %v86
    %241 = vmatprep.subr.mxu0 0.0
    %242 = vmatpush1.msra.mxu0 %v87
    %243 = vmatprep.subr.mxu0 0.0
    %244 = vmatpush1.msra.mxu0 %v88
    %245 = vmatprep.subr.mxu0 0.0
    %246 = vmatpush1.msra.mxu0 %v89
    %247 = vmatprep.subr.mxu0 0.0
    %248 = vmatpush1.msra.mxu0 %v90
    %249 = vmatprep.subr.mxu0 0.0
    %250 = vmatpush1.msra.mxu0 %v91
    %251 = vmatprep.subr.mxu0 0.0
    %252 = vmatpush1.msra.mxu0 %v92
    %253 = vmatprep.subr.mxu0 0.0
    %254 = vmatpush1.msra.mxu0 %v93
    %255 = vmatprep.subr.mxu0 0.0
    %256 = vmatpush1.msra.mxu0 %v94
    %257 = vmatprep.subr.mxu0 0.0
    %258 = vmatpush1.msra.mxu0 %v95
    %259 = vmatprep.subr.mxu0 0.0
    %260 = vmatpush1.msra.mxu0 %v96
    %261 = vmatprep.subr.mxu0 0.0
    %262 = vmatpush1.msra.mxu0 %v97
    %263 = vmatprep.subr.mxu0 0.0
    %264 = vmatpush1.msra.mxu0 %v98
    %265 = vmatprep.subr.mxu0 0.0
    %266 = vmatpush1.msra.mxu0 %v99
    %267 = vmatprep.subr.mxu0 0.0
    %268 = vmatpush1.msra.mxu0 %v100
    %269 = vmatprep.subr.mxu0 0.0
    %270 = vmatpush1.msra.mxu0 %v101
    %271 = vmatprep.subr.mxu0 0.0
    %272 = vmatpush1.msra.mxu0 %v102
    %273 = vmatprep.subr.mxu0 0.0
    %274 = vmatpush1.msra.mxu0 %v103
    %275 = vmatprep.subr.mxu0 0.0
    %276 = vmatpush1.msra.mxu0 %v104
    %277 = vmatprep.subr.mxu0 0.0
    %278 = vmatpush1.msra.mxu0 %v105
    %279 = vmatprep.subr.mxu0 0.0
    %280 = vmatpush1.msra.mxu0 %v106
    %281 = vmatprep.subr.mxu0 0.0
    %282 = vmatpush1.msra.mxu0 %v107
    %283 = vmatprep.subr.mxu0 0.0
    %284 = vmatpush1.msra.mxu0 %v108
    %285 = vmatprep.subr.mxu0 0.0
    %286 = vmatpush1.msra.mxu0 %v109
    %287 = vmatprep.subr.mxu0 0.0
    %288 = vmatpush1.msra.mxu0 %v110
    %289 = vmatprep.subr.mxu0 0.0
    %290 = vmatpush1.msra.mxu0 %v111
    %291 = vmatprep.mubr.f32.mxu0 %v44
    %292 = vmatmul.mubr.f32.gmra.mrb[0].mxu0 %v43
    %v293 = vpop.f32.mrb[0].mxu0
    %v294 = vadd.f32 %v224, %v293
    %v295 = vpop.f32.mrb[0].mxu0
    %296 = vdwg.mxu0
    %297 = vmatprep.subr.mxu0 0.0
    %298 = vmatpush1.msra.mxu0 %v112
    %299 = vmatprep.subr.mxu0 0.0
    %300 = vmatpush1.msra.mxu0 %v113
    %301 = vmatprep.subr.mxu0 0.0
    %302 = vmatpush1.msra.mxu0 %v114
    %303 = vmatprep.subr.mxu0 0.0
    %304 = vmatpush1.msra.mxu0 %v115
    %305 = vmatprep.subr.mxu0 0.0
    %306 = vmatpush1.msra.mxu0 %v116
    %307 = vmatprep.subr.mxu0 0.0
    %308 = vmatpush1.msra.mxu0 %v117
    %309 = vmatprep.subr.mxu0 0.0
    %310 = vmatpush1.msra.mxu0 %v118
    %311 = vmatprep.subr.mxu0 0.0
    %312 = vmatpush1.msra.mxu0 %v119
    %313 = vmatprep.subr.mxu0 0.0
    %314 = vmatpush1.msra.mxu0 %v120
    %315 = vmatprep.subr.mxu0 0.0
    %316 = vmatpush1.msra.mxu0 %v121
    %317 = vmatprep.subr.mxu0 0.0
    %318 = vmatpush1.msra.mxu0 %v122
    %319 = vmatprep.subr.mxu0 0.0
    %320 = vmatpush1.msra.mxu0 %v123
    %321 = vmatprep.subr.mxu0 0.0
    %322 = vmatpush1.msra.mxu0 %v124
    %323 = vmatprep.subr.mxu0 0.0
    %324 = vmatpush1.msra.mxu0 %v125
    %325 = vmatprep.subr.mxu0 0.0
    %326 = vmatpush1.msra.mxu0 %v126
    %327 = vmatprep.subr.mxu0 0.0
    %328 = vmatpush1.msra.mxu0 %v127
    %329 = vmatprep.subr.mxu0 0.0
    %330 = vmatpush1.msra.mxu0 %v128
    %331 = vmatprep.subr.mxu0 0.0
    %332 = vmatpush1.msra.mxu0 %v129
    %333 = vmatprep.subr.mxu0 0.0
    %334 = vmatpush1.msra.mxu0 %v130
    %335 = vmatprep.subr.mxu0 0.0
    %336 = vmatpush1.msra.mxu0 %v131
    %337 = vmatprep.subr.mxu0 0.0
    %338 = vmatpush1.msra.mxu0 %v132
    %339 = vmatprep.subr.mxu0 0.0
    %340 = vmatpush1.msra.mxu0 %v133
    %341 = vmatprep.subr.mxu0 0.0
    %342 = vmatpush1.msra.mxu0 %v134
    %343 = vmatprep.subr.mxu0 0.0
    %344 = vmatpush1.msra.mxu0 %v135
    %345 = vmatprep.subr.mxu0 0.0
    %346 = vmatpush1.msra.mxu0 %v136
    %347 = vmatprep.subr.mxu0 0.0
    %348 = vmatpush1.msra.mxu0 %v137
    %349 = vmatprep.subr.mxu0 0.0
    %350 = vmatpush1.msra.mxu0 %v138
    %351 = vmatprep.subr.mxu0 0.0
    %352 = vmatpush1.msra.mxu0 %v139
    %353 = vmatprep.subr.mxu0 0.0
    %354 = vmatpush1.msra.mxu0 %v140
    %355 = vmatprep.subr.mxu0 0.0
    %356 = vmatpush1.msra.mxu0 %v141
    %357 = vmatprep.subr.mxu0 0.0
    %358 = vmatpush1.msra.mxu0 %v142
    %359 = vmatprep.subr.mxu0 0.0
    %360 = vmatpush1.msra.mxu0 %v143
    %361 = vmatprep.mubr.f32.mxu0 %v46
    %362 = vmatmul.mubr.f32.gmra.mrb[0].mxu0 %v45
    %v363 = vpop.f32.mrb[0].mxu0
    %v364 = vadd.f32 %v294, %v363
    %v365 = vpop.f32.mrb[0].mxu0
    %366 = vdwg.mxu0
    %367 = vmatprep.subr.mxu0 0.0
    %368 = vmatpush1.msra.mxu0 %v144
    %369 = vmatprep.subr.mxu0 0.0
    %370 = vmatpush1.msra.mxu0 %v145
    %371 = vmatprep.subr.mxu0 0.0
    %372 = vmatpush1.msra.mxu0 0.0
    %373 = vmatprep.subr.mxu0 0.0
    %374 = vmatpush1.msra.mxu0 0.0
    %375 = vmatprep.subr.mxu0 0.0
    %376 = vmatpush1.msra.mxu0 0.0
    %377 = vmatprep.subr.mxu0 0.0
    %378 = vmatpush1.msra.mxu0 0.0
    %379 = vmatprep.subr.mxu0 0.0
    %380 = vmatpush1.msra.mxu0 0.0
    %381 = vmatprep.subr.mxu0 0.0
    %382 = vmatpush1.msra.mxu0 0.0
    %383 = vmatprep.subr.mxu0 0.0
    %384 = vmatpush1.msra.mxu0 0.0
    %385 = vmatprep.subr.mxu0 0.0
    %386 = vmatpush1.msra.mxu0 0.0
    %387 = vmatprep.subr.mxu0 0.0
    %388 = vmatpush1.msra.mxu0 0.0
    %389 = vmatprep.subr.mxu0 0.0
    %390 = vmatpush1.msra.mxu0 0.0
    %391 = vmatprep.subr.mxu0 0.0
    %392 = vmatpush1.msra.mxu0 0.0
    %393 = vmatprep.subr.mxu0 0.0
    %394 = vmatpush1.msra.mxu0 0.0
    %395 = vmatprep.subr.mxu0 0.0
    %396 = vmatpush1.msra.mxu0 0.0
    %397 = vmatprep.subr.mxu0 0.0
    %398 = vmatpush1.msra.mxu0 0.0
    %399 = vmatprep.subr.mxu0 0.0
    %400 = vmatpush1.msra.mxu0 0.0
    %401 = vmatprep.subr.mxu0 0.0
    %402 = vmatpush1.msra.mxu0 0.0
    %403 = vmatprep.subr.mxu0 0.0
    %404 = vmatpush1.msra.mxu0 0.0
    %405 = vmatprep.subr.mxu0 0.0
    %406 = vmatpush1.msra.mxu0 0.0
    %407 = vmatprep.subr.mxu0 0.0
    %408 = vmatpush1.msra.mxu0 0.0
    %409 = vmatprep.subr.mxu0 0.0
    %410 = vmatpush1.msra.mxu0 0.0
    %411 = vmatprep.subr.mxu0 0.0
    %412 = vmatpush1.msra.mxu0 0.0
    %413 = vmatprep.subr.mxu0 0.0
    %414 = vmatpush1.msra.mxu0 0.0
    %415 = vmatprep.subr.mxu0 0.0
    %416 = vmatpush1.msra.mxu0 0.0
    %417 = vmatprep.subr.mxu0 0.0
    %418 = vmatpush1.msra.mxu0 0.0
    %419 = vmatprep.subr.mxu0 0.0
    %420 = vmatpush1.msra.mxu0 0.0
    %421 = vmatprep.subr.mxu0 0.0
    %422 = vmatpush1.msra.mxu0 0.0
    %423 = vmatprep.subr.mxu0 0.0
    %424 = vmatpush1.msra.mxu0 0.0
    %425 = vmatprep.subr.mxu0 0.0
    %426 = vmatpush1.msra.mxu0 0.0
    %427 = vmatprep.subr.mxu0 0.0
    %428 = vmatpush1.msra.mxu0 0.0
    %429 = vmatprep.subr.mxu0 0.0
    %430 = vmatpush1.msra.mxu0 0.0
    %431 = vmatprep.mubr.f32.mxu0 0.0
    %432 = vmatmul.mubr.f32.gmra.mrb[0].mxu0 %v155
    %v433 = vpop.f32.mrb[0].mxu0
    %v434 = vadd.f32 %v364, %v433
    %v435 = vpop.f32.mrb[0].mxu0
    %436 = vdwg.mxu0
    %v437 = vmax.f32 %v434, 0.0
    %v438 = vld [vmem:[%s3] sm:$0xff]
    %v439 = vld [vmem:[%s3 + $0x8] sm:$0xff]
    %v440 = vld [vmem:[%s3 + $0x10] sm:$0xff]
    %v441 = vld [vmem:[%s3 + $0x18] sm:$0xff]
    %v442 = vld [vmem:[%s3 + $0x20] sm:$0xff]
    %v443 = vld [vmem:[%s3 + $0x28] sm:$0xff]
    %v444 = vld [vmem:[%s3 + $0x30] sm:$0xff]
    %v445 = vld [vmem:[%s3 + $0x38] sm:$0xff]
    %v446 = vld [vmem:[%s3 + $0x40] sm:$0xff]
    %v447 = vld [vmem:[%s3 + $0x48] sm:$0xff]
    %v448 = vld [vmem:[%s3 + $0x50] sm:$0xff]
    %v449 = vld [vmem:[%s3 + $0x58] sm:$0xff]
    %v450 = vld [vmem:[%s3 + $0x60] sm:$0xff]
    %v451 = vld [vmem:[%s3 + $0x68] sm:$0xff]
    %v452 = vld [vmem:[%s3 + $0x70] sm:$0xff]
    %v453 = vld [vmem:[%s3 + $0x78] sm:$0xff]
    %v454 = vld [vmem:[%s4] sm:$0x1]
    %v456 = vlaneseq
    %v457 = vshrl.u32 %v456, 7
    %v458 = vsub.s32 0, %v457
    %v459 = vrot.slane %v454, %v458
    %461 = vmatprep.subr.mxu0 0.0
    %462 = vmatpush1.msra.mxu0 %v438
    %463 = vmatprep.subr.mxu0 0.0
    %464 = vmatpush1.msra.mxu0 %v439
    %465 = vmatprep.subr.mxu0 0.0
    %466 = vmatpush1.msra.mxu0 %v440
    %467 = vmatprep.subr.mxu0 0.0
    %468 = vmatpush1.msra.mxu0 %v441
    %469 = vmatprep.subr.mxu0 0.0
    %470 = vmatpush1.msra.mxu0 %v442
    %471 = vmatprep.subr.mxu0 0.0
    %472 = vmatpush1.msra.mxu0 %v443
    %473 = vmatprep.subr.mxu0 0.0
    %474 = vmatpush1.msra.mxu0 %v444
    %475 = vmatprep.subr.mxu0 0.0
    %476 = vmatpush1.msra.mxu0 %v445
    %477 = vmatprep.subr.mxu0 0.0
    %478 = vmatpush1.msra.mxu0 %v446
    %479 = vmatprep.subr.mxu0 0.0
    %480 = vmatpush1.msra.mxu0 %v447
    %481 = vmatprep.subr.mxu0 0.0
    %482 = vmatpush1.msra.mxu0 %v448
    %483 = vmatprep.subr.mxu0 0.0
    %484 = vmatpush1.msra.mxu0 %v449
    %485 = vmatprep.subr.mxu0 0.0
    %486 = vmatpush1.msra.mxu0 %v450
    %487 = vmatprep.subr.mxu0 0.0
    %488 = vmatpush1.msra.mxu0 %v451
    %489 = vmatprep.subr.mxu0 0.0
    %490 = vmatpush1.msra.mxu0 %v452
    %491 = vmatprep.subr.mxu0 0.0
    %492 = vmatpush1.msra.mxu0 %v453
    %493 = vmatprep.subr.mxu0 0.0
    %494 = vmatpush1.msra.mxu0 0.0
    %495 = vmatprep.subr.mxu0 0.0
    %496 = vmatpush1.msra.mxu0 0.0
    %497 = vmatprep.subr.mxu0 0.0
    %498 = vmatpush1.msra.mxu0 0.0
    %499 = vmatprep.subr.mxu0 0.0
    %500 = vmatpush1.msra.mxu0 0.0
    %501 = vmatprep.subr.mxu0 0.0
    %502 = vmatpush1.msra.mxu0 0.0
    %503 = vmatprep.subr.mxu0 0.0
    %504 = vmatpush1.msra.mxu0 0.0
    %505 = vmatprep.subr.mxu0 0.0
    %506 = vmatpush1.msra.mxu0 0.0
    %507 = vmatprep.subr.mxu0 0.0
    %508 = vmatpush1.msra.mxu0 0.0
    %509 = vmatprep.subr.mxu0 0.0
    %510 = vmatpush1.msra.mxu0 0.0
    %511 = vmatprep.subr.mxu0 0.0
    %512 = vmatpush1.msra.mxu0 0.0
    %513 = vmatprep.subr.mxu0 0.0
    %514 = vmatpush1.msra.mxu0 0.0
    %515 = vmatprep.subr.mxu0 0.0
    %516 = vmatpush1.msra.mxu0 0.0
    %517 = vmatprep.subr.mxu0 0.0
    %518 = vmatpush1.msra.mxu0 0.0
    %519 = vmatprep.subr.mxu0 0.0
    %520 = vmatpush1.msra.mxu0 0.0
    %521 = vmatprep.subr.mxu0 0.0
    %522 = vmatpush1.msra.mxu0 0.0
    %523 = vmatprep.subr.mxu0 0.0
    %524 = vmatpush1.msra.mxu0 0.0
    %525 = vmatprep.mubr.f32.mxu0 0.0
    %526 = vmatmul.mubr.f32.gmra.mrb[0].mxu0 %v437
    %v527 = vpop.f32.mrb[0].mxu0
    %v528 = vadd.f32 %v459, %v527
    %v529 = vpop.f32.mrb[0].mxu0
    %530 = vdwg.mxu0
    %v531 = vmax.f32 %v528, 0.0
    %v532 = vld [vmem:[%s5] sm:$0xff]
    %v533 = vld [vmem:[%s5 + $0x8] sm:$0xff]
    %v534 = vld [vmem:[%s5 + $0x10] sm:$0xff]
    %v535 = vld [vmem:[%s5 + $0x18] sm:$0xff]
    %v536 = vld [vmem:[%s5 + $0x20] sm:$0xff]
    %v537 = vld [vmem:[%s5 + $0x28] sm:$0xff]
    %v538 = vld [vmem:[%s5 + $0x30] sm:$0xff]
    %v539 = vld [vmem:[%s5 + $0x38] sm:$0xff]
    %v540 = vld [vmem:[%s6] sm:$0x1]
    %v542 = vlaneseq
    %v543 = vshrl.u32 %v542, 7
    %v544 = vsub.s32 0, %v543
    %v545 = vrot.slane %v540, %v544
    %vm547 = vcmask 523264
    %v549 = vsel %vm547, %v531, 0
    %551 = vmatprep.subr.mxu0 0.0
    %552 = vmatpush1.msra.mxu0 %v532
    %553 = vmatprep.subr.mxu0 0.0
    %554 = vmatpush1.msra.mxu0 %v533
    %555 = vmatprep.subr.mxu0 0.0
    %556 = vmatpush1.msra.mxu0 %v534
    %557 = vmatprep.subr.mxu0 0.0
    %558 = vmatpush1.msra.mxu0 %v535
    %559 = vmatprep.subr.mxu0 0.0
    %560 = vmatpush1.msra.mxu0 %v536
    %561 = vmatprep.subr.mxu0 0.0
    %562 = vmatpush1.msra.mxu0 %v537
    %563 = vmatprep.subr.mxu0 0.0
    %564 = vmatpush1.msra.mxu0 %v538
    %565 = vmatprep.subr.mxu0 0.0
    %566 = vmatpush1.msra.mxu0 %v539
    %567 = vmatprep.subr.mxu0 0.0
    %568 = vmatpush1.msra.mxu0 0.0
    %569 = vmatprep.subr.mxu0 0.0
    %570 = vmatpush1.msra.mxu0 0.0
    %571 = vmatprep.subr.mxu0 0.0
    %572 = vmatpush1.msra.mxu0 0.0
    %573 = vmatprep.subr.mxu0 0.0
    %574 = vmatpush1.msra.mxu0 0.0
    %575 = vmatprep.subr.mxu0 0.0
    %576 = vmatpush1.msra.mxu0 0.0
    %577 = vmatprep.subr.mxu0 0.0
    %578 = vmatpush1.msra.mxu0 0.0
    %579 = vmatprep.subr.mxu0 0.0
    %580 = vmatpush1.msra.mxu0 0.0
    %581 = vmatprep.subr.mxu0 0.0
    %582 = vmatpush1.msra.mxu0 0.0
    %583 = vmatprep.subr.mxu0 0.0
    %584 = vmatpush1.msra.mxu0 0.0
    %585 = vmatprep.subr.mxu0 0.0
    %586 = vmatpush1.msra.mxu0 0.0
    %587 = vmatprep.subr.mxu0 0.0
    %588 = vmatpush1.msra.mxu0 0.0
    %589 = vmatprep.subr.mxu0 0.0
    %590 = vmatpush1.msra.mxu0 0.0
    %591 = vmatprep.subr.mxu0 0.0
    %592 = vmatpush1.msra.mxu0 0.0
    %593 = vmatprep.subr.mxu0 0.0
    %594 = vmatpush1.msra.mxu0 0.0
    %595 = vmatprep.subr.mxu0 0.0
    %596 = vmatpush1.msra.mxu0 0.0
    %597 = vmatprep.subr.mxu0 0.0
    %598 = vmatpush1.msra.mxu0 0.0
    %599 = vmatprep.subr.mxu0 0.0
    %600 = vmatpush1.msra.mxu0 0.0
    %601 = vmatprep.subr.mxu0 0.0
    %602 = vmatpush1.msra.mxu0 0.0
    %603 = vmatprep.subr.mxu0 0.0
    %604 = vmatpush1.msra.mxu0 0.0
    %605 = vmatprep.subr.mxu0 0.0
    %606 = vmatpush1.msra.mxu0 0.0
    %607 = vmatprep.subr.mxu0 0.0
    %608 = vmatpush1.msra.mxu0 0.0
    %609 = vmatprep.subr.mxu0 0.0
    %610 = vmatpush1.msra.mxu0 0.0
    %611 = vmatprep.subr.mxu0 0.0
    %612 = vmatpush1.msra.mxu0 0.0
    %613 = vmatprep.subr.mxu0 0.0
    %614 = vmatpush1.msra.mxu0 0.0
    %615 = vmatprep.mubr.f32.mxu0 0.0
    %616 = vmatmul.mubr.f32.gmra.mrb[0].mxu0 %v549
    %v617 = vpop.f32.mrb[0].mxu0
    %v618 = vadd.f32 %v545, %v617
    %v619 = vpop.f32.mrb[0].mxu0
    %620 = vdwg.mxu0
    %vm621 = vcmask 261120
    %622 = vst.msk [vmem:[#allocation5] sm:$0xff] %vm621, %v618
    // Predicated region
    $region34: #{encoder_forward.1} parent=1 // pred_check
      _
    $region35: #{encoder_forward.1} parent=1 // pred_check_branch
      %624 = sbr.rel (0) target = $region37
    $region36: #{encoder_forward.1} parent=1 // pred_region
      %s626 = ssub.s32 128, 128
      %627 = vsyncadd [#allocation4], %s626
      %s629 = sshll.u32 [#allocation5], 4
      %s630 = int_to_ptr.vmem [resolvable:$true] %s629
      %632 = dma.vmem_to_hbm [thread:$0]  %s630, 128, %s7, [#allocation4]
    $region37: #{encoder_forward.1} parent=1 // pred_fallthru
      _
    // Predicated region
    $region38: #{encoder_forward.1} parent=1 // pred_check
      _
    $region39: #{encoder_forward.1} parent=1 // pred_check_branch
      %634 = sbr.rel (0) target = $region41
    $region40: #{encoder_forward.1} parent=1 // pred_region
      %635 = dma.done [#allocation4], 128
    $region41: #{encoder_forward.1} parent=1 // pred_fallthru
      _
    %636 = vsyncpa [#allocation3], 1
    %637 = vsyncpa [#allocation4], 1

</llo_original>
